<compile_context>
chip_gen: v5e
topology: v5e:2x2
jax: 0.10.0
libtpu: 0.0.40
codegen_flags: <defaults>
</compile_context>

<pallas_src>
import jax
import jax.numpy as jnp
from jax.experimental import pallas as pl
from jax.experimental.pallas import tpu as pltpu


def _attention_body(q, k, v, mask, o_ref, attn_ref):
    # q: (tq, Dk), k: (Lk, Dk), v: (Lk, Dv), mask: (tq, Lk) int32 or None.
    d_k = k.shape[-1]
    scale = 1.0 / (d_k ** 0.5)

    # Q K^T on the MXU, f32 accumulation, then scale (VPU).
    score = jnp.dot(q, k.T, preferred_element_type=jnp.float32) * scale

    if mask is not None:
        score = jnp.where(mask == 0, -jnp.inf, score)   # masked_fill(mask==0, -inf)

    # Numerically-stable softmax along the key axis.
    m = jnp.max(score, axis=-1, keepdims=True)
    e = jnp.exp(score - m)
    p = e / jnp.sum(e, axis=-1, keepdims=True)

    attn_ref[...] = p.astype(attn_ref.dtype)

    # P V on the MXU.
    o_ref[...] = jnp.dot(p.astype(v.dtype), v,
                         preferred_element_type=jnp.float32).astype(o_ref.dtype)


def _sdpa_kernel(q_ref, k_ref, v_ref, o_ref, attn_ref):
    _attention_body(q_ref[...], k_ref[...], v_ref[...], None, o_ref, attn_ref)


def _sdpa_kernel_masked(q_ref, k_ref, v_ref, mask_ref, o_ref, attn_ref):
    _attention_body(q_ref[...], k_ref[...], v_ref[...], mask_ref[...], o_ref, attn_ref)


def scaled_dot_product_attention(query, key, value, mask=None, *, block_q=128):
    """query: (B, Lq, Dk); key: (B, Lk, Dk); value: (B, Lk, Dv).

    Returns (output (B, Lq, Dv), attn (B, Lq, Lk)) — same as the PyTorch module's
    forward (with dropout in eval mode).
    """
    B, Lq, Dk = query.shape
    Bk, Lk, Dk2 = key.shape
    Bv, Lkv, Dv = value.shape
    assert Bk == B and Bv == B and Lkv == Lk and Dk2 == Dk

    # Query-tile size: must divide Lq and be a multiple of 8 (sublane rule),
    # otherwise fall back to one full-Lq block (always legal).
    if Lq % block_q != 0 or block_q % 8 != 0:
        block_q = Lq
    grid = (B, Lq // block_q)

    in_specs = [
        pl.BlockSpec((None, block_q, Dk), lambda b, i: (b, i, 0)),   # Q tile
        pl.BlockSpec((None, Lk, Dk), lambda b, i: (b, 0, 0)),        # full K (resident over q-tiles)
        pl.BlockSpec((None, Lk, Dv), lambda b, i: (b, 0, 0)),        # full V (resident over q-tiles)
    ]
    inputs = [query, key, value]
    kernel = _sdpa_kernel

    if mask is not None:
        mask = jnp.broadcast_to(jnp.asarray(mask), (B, Lq, Lk)).astype(jnp.int32)
        in_specs.append(pl.BlockSpec((None, block_q, Lk), lambda b, i: (b, i, 0)))
        inputs.append(mask)
        kernel = _sdpa_kernel_masked

    out_shape = (
        jax.ShapeDtypeStruct((B, Lq, Dv), query.dtype),   # attention output
        jax.ShapeDtypeStruct((B, Lq, Lk), query.dtype),   # attention weights
    )
    out_specs = (
        pl.BlockSpec((None, block_q, Dv), lambda b, i: (b, i, 0)),
        pl.BlockSpec((None, block_q, Lk), lambda b, i: (b, i, 0)),
    )

    return pl.pallas_call(
        kernel,
        out_shape=out_shape,
        grid_spec=pl.GridSpec(grid=grid, in_specs=in_specs, out_specs=out_specs),
        compiler_params=pltpu.CompilerParams(
            dimension_semantics=("parallel", "parallel"),
        ),
    )(*inputs)


if __name__ == "__main__":
    # Small but TPU-friendly (lane-dense) shapes: batch=2, seq=128, d_model=128.
    B, S, D = 2, 128, 128

    key0 = jax.random.PRNGKey(0)
    kq, kk, kv = jax.random.split(key0, 3)
    q = jax.random.normal(kq, (B, S, D), dtype=jnp.float32)
    k = jax.random.normal(kk, (B, S, D), dtype=jnp.float32)
    v = jax.random.normal(kv, (B, S, D), dtype=jnp.float32)

    def ref_sdpa(q, k, v, mask=None):
        score = jnp.einsum("bqd,bkd->bqk", q, k,
                           precision=jax.lax.Precision.HIGHEST) / (k.shape[-1] ** 0.5)
        if mask is not None:
            score = jnp.where(mask == 0, -jnp.inf, score)
        attn = jax.nn.softmax(score, axis=-1)
        out = jnp.einsum("bqk,bkd->bqd", attn, v, precision=jax.lax.Precision.HIGHEST)
        return out, attn

    # --- unmasked path ---
    out, attn = scaled_dot_product_attention(q, k, v)
    out, attn = jax.block_until_ready((out, attn))
    ref_out, ref_attn = ref_sdpa(q, k, v)

    assert out.shape == (B, S, D) and attn.shape == (B, S, S)
    assert jnp.allclose(attn.sum(axis=-1), 1.0, atol=1e-3), "softmax rows must sum to 1"
    assert jnp.allclose(out, ref_out, atol=2e-2, rtol=2e-2), "output mismatch vs reference"
    assert jnp.allclose(attn, ref_attn, atol=2e-2, rtol=2e-2), "attn mismatch vs reference"

    # --- masked (causal) path ---
    mask = jnp.tril(jnp.ones((S, S), dtype=jnp.int32))[None, :, :]
    out_m, attn_m = scaled_dot_product_attention(q, k, v, mask=mask)
    out_m, attn_m = jax.block_until_ready((out_m, attn_m))
    ref_out_m, ref_attn_m = ref_sdpa(q, k, v, mask=mask)

    assert jnp.allclose(out_m, ref_out_m, atol=2e-2, rtol=2e-2), "masked output mismatch"
    assert jnp.allclose(attn_m, ref_attn_m, atol=2e-2, rtol=2e-2), "masked attn mismatch"
    assert jnp.allclose(jnp.where(mask == 0, attn_m, 0.0), 0.0), "masked positions must get zero weight"

    print("KERNEL_OK")
</pallas_src>

<mosaic_0001>
module attributes {stable_mosaic.version = 11 : i64} {
  func.func @_sdpa_kernel(%arg0: i32, %arg1: i32, %arg2: memref<1x128x128xf32, #tpu.memory_space<vmem>>, %arg3: memref<1x128x128xf32, #tpu.memory_space<vmem>>, %arg4: memref<1x128x128xf32, #tpu.memory_space<vmem>>, %arg5: memref<1x128x128xf32, #tpu.memory_space<vmem>>, %arg6: memref<1x128x128xf32, #tpu.memory_space<vmem>>) attributes {dimension_semantics = [#tpu.dimension_semantics<parallel>, #tpu.dimension_semantics<parallel>], iteration_bounds = array<i64: 2, 1>, scalar_prefetch = 0 : i64, scratch_operands = 0 : i64, tpu.core_type = #tpu.core_type<tc>, window_params = [{transform_indices = @transform_0, window_bounds = array<i64: 1, 128, 128>}, {transform_indices = @transform_1, window_bounds = array<i64: 1, 128, 128>}, {transform_indices = @transform_2, window_bounds = array<i64: 1, 128, 128>}, {transform_indices = @transform_3, window_bounds = array<i64: 1, 128, 128>}, {transform_indices = @transform_4, window_bounds = array<i64: 1, 128, 128>}]} {
    %c0 = arith.constant 0 : index
    %c0_0 = arith.constant 0 : index
    %c0_1 = arith.constant 0 : index
    %0 = vector.load %arg2[%c0, %c0_0, %c0_1] : memref<1x128x128xf32, #tpu.memory_space<vmem>>, vector<1x128x128xf32>
    %1 = vector.shape_cast %0 : vector<1x128x128xf32> to vector<128x128xf32>
    %c0_2 = arith.constant 0 : index
    %c0_3 = arith.constant 0 : index
    %c0_4 = arith.constant 0 : index
    %2 = vector.load %arg3[%c0_2, %c0_3, %c0_4] : memref<1x128x128xf32, #tpu.memory_space<vmem>>, vector<1x128x128xf32>
    %3 = vector.shape_cast %2 : vector<1x128x128xf32> to vector<128x128xf32>
    %c0_5 = arith.constant 0 : index
    %c0_6 = arith.constant 0 : index
    %c0_7 = arith.constant 0 : index
    %4 = vector.load %arg4[%c0_5, %c0_6, %c0_7] : memref<1x128x128xf32, #tpu.memory_space<vmem>>, vector<1x128x128xf32>
    %5 = vector.shape_cast %4 : vector<1x128x128xf32> to vector<128x128xf32>
    %6 = tpu.transpose %3, [1, 0] : vector<128x128xf32> -> vector<128x128xf32>
    %cst = arith.constant dense<0.000000e+00> : vector<128x128xf32>
    %7 = tpu.matmul %1, %6, %cst {dimension_numbers = #tpu.dot_dimension_numbers<[1], [0], [0], [1], [0, 0, 1, 1], [], []>} : vector<128x128xf32>, vector<128x128xf32>, vector<128x128xf32> -> vector<128x128xf32>
    %cst_8 = arith.constant 0.0883883461 : f32
    %8 = vector.broadcast %cst_8 : f32 to vector<128x128xf32>
    %9 = arith.mulf %7, %8 : vector<128x128xf32>
    %cst_9 = arith.constant dense<0xFF800000> : vector<128xf32>
    %10 = vector.multi_reduction <maximumf>, %9, %cst_9 [1] : vector<128x128xf32> to vector<128xf32>
    %11 = vector.shape_cast %10 : vector<128xf32> to vector<128x1xf32>
    %12 = vector.broadcast %11 : vector<128x1xf32> to vector<128x128xf32>
    %13 = arith.subf %9, %12 : vector<128x128xf32>
    %14 = math.exp %13 : vector<128x128xf32>
    %cst_10 = arith.constant dense<0.000000e+00> : vector<128xf32>
    %15 = vector.multi_reduction <add>, %14, %cst_10 [1] : vector<128x128xf32> to vector<128xf32>
    %16 = vector.shape_cast %15 : vector<128xf32> to vector<128x1xf32>
    %17 = vector.broadcast %16 : vector<128x1xf32> to vector<128x128xf32>
    %18 = arith.divf %14, %17 : vector<128x128xf32>
    %c0_11 = arith.constant 0 : index
    %c0_12 = arith.constant 0 : index
    %c0_13 = arith.constant 0 : index
    %19 = vector.load %arg6[%c0_11, %c0_12, %c0_13] : memref<1x128x128xf32, #tpu.memory_space<vmem>>, vector<1x128x128xf32>
    %20 = vector.shape_cast %19 : vector<1x128x128xf32> to vector<128x128xf32>
    %21 = vector.shape_cast %18 : vector<128x128xf32> to vector<1x128x128xf32>
    tpu.vector_store %arg6[%c0_11, %c0_12, %c0_13], %21 {strides = array<i32>} : memref<1x128x128xf32, #tpu.memory_space<vmem>>, vector<1x128x128xf32>,
    %cst_14 = arith.constant dense<0.000000e+00> : vector<128x128xf32>
    %22 = tpu.matmul %18, %5, %cst_14 {dimension_numbers = #tpu.dot_dimension_numbers<[1], [0], [0], [1], [0, 0, 1, 1], [], []>} : vector<128x128xf32>, vector<128x128xf32>, vector<128x128xf32> -> vector<128x128xf32>
    %c0_15 = arith.constant 0 : index
    %c0_16 = arith.constant 0 : index
    %c0_17 = arith.constant 0 : index
    %23 = vector.load %arg5[%c0_15, %c0_16, %c0_17] : memref<1x128x128xf32, #tpu.memory_space<vmem>>, vector<1x128x128xf32>
    %24 = vector.shape_cast %23 : vector<1x128x128xf32> to vector<128x128xf32>
    %25 = vector.shape_cast %22 : vector<128x128xf32> to vector<1x128x128xf32>
    tpu.vector_store %arg5[%c0_15, %c0_16, %c0_17], %25 {strides = array<i32>} : memref<1x128x128xf32, #tpu.memory_space<vmem>>, vector<1x128x128xf32>,
    return
  }
  func.func @transform_0(%arg0: i32, %arg1: i32) -> (i32, i32, i32) {
    %c0_i32 = arith.constant 0 : i32
    %c0_i32_0 = arith.constant 0 : i32
    return %arg0, %arg1, %c0_i32 : i32, i32, i32
  }
  func.func @transform_1(%arg0: i32, %arg1: i32) -> (i32, i32, i32) {
    %c0_i32 = arith.constant 0 : i32
    %c0_i32_0 = arith.constant 0 : i32
    %c0_i32_1 = arith.constant 0 : i32
    return %arg0, %c0_i32, %c0_i32_0 : i32, i32, i32
  }
  func.func @transform_2(%arg0: i32, %arg1: i32) -> (i32, i32, i32) {
    %c0_i32 = arith.constant 0 : i32
    %c0_i32_0 = arith.constant 0 : i32
    %c0_i32_1 = arith.constant 0 : i32
    return %arg0, %c0_i32, %c0_i32_0 : i32, i32, i32
  }
  func.func @transform_3(%arg0: i32, %arg1: i32) -> (i32, i32, i32) {
    %c0_i32 = arith.constant 0 : i32
    %c0_i32_0 = arith.constant 0 : i32
    return %arg0, %arg1, %c0_i32 : i32, i32, i32
  }
  func.func @transform_4(%arg0: i32, %arg1: i32) -> (i32, i32, i32) {
    %c0_i32 = arith.constant 0 : i32
    %c0_i32_0 = arith.constant 0 : i32
    return %arg0, %arg1, %c0_i32 : i32, i32, i32
  }
}

</mosaic_0001>

<llo_original>
// kernel: tpu_custom_call.1
$region0: #{tpu_custom_call.1}
  #allocation0 [shape = 'u32[]', space=smem, size = 0x4, offset = 0x4, fixed_abs, tag = 'smem constant byte address 0x4 - core index']
  #allocation1 [shape = 'u32[72,128]{1,0:T(1,128)}', space=vmem, size = 0x9000, scoped, tag = 'internal scratch']
  %s0 = inlined_call_operand.hbm [shape: f32[2,128,128], index: 0, kind: input, shape index: {}]
  %s1 = inlined_call_operand.hbm [shape: f32[2,128,128], index: 1, kind: input, shape index: {}]
  %s2 = inlined_call_operand.hbm [shape: f32[2,128,128], index: 2, kind: input, shape index: {}]
  %s3 = inlined_call_operand.hbm [shape: f32[2,128,128], index: 3, kind: output, shape index: {0}]
  %s4 = inlined_call_operand.hbm [shape: f32[2,128,128], index: 4, kind: output, shape index: {1}]
  %5 = xla_tuple %s3, %s4
  %s6 = sld [smem:[#allocation0]]
  $region65: #{tpu_custom_call.1} parent=0
    _
  %s8 = ssub.s32 1, %s6
  %s9 = scalar_select 0, %s8, %s6
  $region1: #{tpu_custom_call.1} parent=0
    #allocation2 [shape = 'u8[131072]{0}', space=vmem, size = 0x20000, scoped, tag = 'input window, operand 0']
    #allocation3 [shape = 's32[2]{0}', space=sflag, size = 0x8, scoped, tag = 'scoped memory for tpu_custom_call.1']
    #allocation4 [shape = 's32[2]{0}', space=sflag, size = 0x8, scoped, tag = 'scoped memory for tpu_custom_call.1']
    #allocation5 [shape = 'u8[131072]{0}', space=vmem, size = 0x20000, scoped, tag = 'input window, operand 1']
    #allocation6 [shape = 's32[2]{0}', space=sflag, size = 0x8, scoped, tag = 'scoped memory for tpu_custom_call.1']
    #allocation7 [shape = 'u8[131072]{0}', space=vmem, size = 0x20000, scoped, tag = 'input window, operand 2']
    #allocation8 [shape = 'u8[131072]{0}', space=vmem, size = 0x20000, scoped, tag = 'output window, operand 0']
    #allocation9 [shape = 'u8[131072]{0}', space=vmem, size = 0x20000, scoped, tag = 'output window, operand 1']
    #allocation10 [shape = 's32[2]{0}', space=sflag, size = 0x8, scoped, tag = 'scoped memory for tpu_custom_call.1']
    %10 = vsyncpa [#allocation3], 0
    %s11 = scalar_lea.sflag [#allocation3], 1
    %12 = vsyncpa %s11, 0
    %13 = vsyncpa [#allocation6], 0
    %s14 = scalar_lea.sflag [#allocation6], 1
    %15 = vsyncpa %s14, 0
    %16 = vsyncpa [#allocation4], 0
    %s17 = scalar_lea.sflag [#allocation4], 1
    %18 = vsyncpa %s17, 0
    %19 = vsyncpa [#allocation10], 0
    %s20 = scalar_lea.sflag [#allocation10], 1
    %21 = vsyncpa %s20, 0
    loop: start=0, step=1, limit=4
    $region2: #{tpu_custom_call.1} parent=1 // loop_pre_header
      _
    $region3: #{tpu_custom_call.1} parent=1 // loop_header
      %s23 = sphi 0, %s27
      %p24 = scmp.ge.s32.totalorder %s23, 4
      %s30 = sphi 0, %s42
      %s31 = sphi 0, %s38
      %s32 = sphi 0, %s30
      %s33 = sphi 0, %s31
      %s34 = sphi 0, %s32
      %s35 = sphi 0, %s33
      %s47 = sphi 0, %s49
      %s50 = sphi 0, %s47
      %s51 = sphi 0, %s50
      %s67 = sphi 0, %s51
      %s73 = sphi 0, %s75
      %s76 = sphi 0, %s73
      %s77 = sphi 0, %s76
      %s93 = sphi 0, %s77
      %s99 = sphi 0, %s101
      %s102 = sphi 0, %s99
      %s103 = sphi 0, %s102
      %s119 = sphi 0, %s103
      %s127 = sphi 0, %s129
      %s130 = sphi 0, %s127
      %s131 = sphi 0, %s130
      %s147 = sphi 0, %s131
      %s155 = sphi 0, %s157
      %s158 = sphi 0, %s155
      %s159 = sphi 0, %s158
      %s175 = sphi 0, %s159
    $region4: #{tpu_custom_call.1} parent=1 // loop_header_branch
      %26 = sbr.rel (%p24) target = $region8
    $region5: #{tpu_custom_call.1} parent=1 // loop_body
      %s28 = ssub.s32 %s23, 1
      %s29 = ssub.s32 %s23, 2
      %s36 = sadd.s32 1, %s31
      %p37 = scmp.ge.s32.totalorder %s36, 1
      %s38 = scalar_select %p37, 0, %s36
      %s39 = sadd.s32 1, %s30
      %s40 = scalar_select %p37, %s39, %s30
      %p41 = scmp.ge.s32.totalorder %s40, 2
      %s42 = scalar_select %p41, 0, %s40
      %s43 = ssub.s32 %s30, %s42
      %s44 = ssub.s32 %s31, %s38
      %s45 = sor.u32 %s43, %s44
      %p46 = scmp.eq.s32.totalorder %s45, 0
      %s48 = sadd.s32 %s47, 1
      %s49 = scalar_select %p46, %s47, %s48
      %p52 = pneg %p46
      %p53 = scmp.eq.s32.totalorder %s23, 1
      %p54 = por %p52, %p53
      %p55 = scmp.ne.s32.totalorder %s47, %s50
      %p56 = scmp.eq.s32.totalorder %s23, 0
      %p57 = por %p55, %p56
      %p58 = scmp.ne.s32.totalorder %s47, %s50
      %p59 = scmp.eq.s32.totalorder %s28, 1
      %p60 = por %p58, %p59
      %p61 = scmp.ne.s32.totalorder %s50, %s51
      %p62 = scmp.eq.s32.totalorder %s28, 0
      %p63 = por %p61, %p62
      %p64 = scmp.ne.s32.totalorder %s50, %s51
      %p65 = scmp.eq.s32.totalorder %s29, 1
      %p66 = por %p64, %p65
      %p68 = scmp.ne.s32.totalorder %s51, %s67
      %p69 = scmp.eq.s32.totalorder %s29, 0
      %p70 = por %p68, %p69
      %s71 = ssub.s32 %s30, %s42
      %p72 = scmp.eq.s32.totalorder %s71, 0
      %s74 = sadd.s32 %s73, 1
      %s75 = scalar_select %p72, %s73, %s74
      %p78 = pneg %p72
      %p79 = scmp.eq.s32.totalorder %s23, 1
      %p80 = por %p78, %p79
      %p81 = scmp.ne.s32.totalorder %s73, %s76
      %p82 = scmp.eq.s32.totalorder %s23, 0
      %p83 = por %p81, %p82
      %p84 = scmp.ne.s32.totalorder %s73, %s76
      %p85 = scmp.eq.s32.totalorder %s28, 1
      %p86 = por %p84, %p85
      %p87 = scmp.ne.s32.totalorder %s76, %s77
      %p88 = scmp.eq.s32.totalorder %s28, 0
      %p89 = por %p87, %p88
      %p90 = scmp.ne.s32.totalorder %s76, %s77
      %p91 = scmp.eq.s32.totalorder %s29, 1
      %p92 = por %p90, %p91
      %p94 = scmp.ne.s32.totalorder %s77, %s93
      %p95 = scmp.eq.s32.totalorder %s29, 0
      %p96 = por %p94, %p95
      %s97 = ssub.s32 %s30, %s42
      %p98 = scmp.eq.s32.totalorder %s97, 0
      %s100 = sadd.s32 %s99, 1
      %s101 = scalar_select %p98, %s99, %s100
      %p104 = pneg %p98
      %p105 = scmp.eq.s32.totalorder %s23, 1
      %p106 = por %p104, %p105
      %p107 = scmp.ne.s32.totalorder %s99, %s102
      %p108 = scmp.eq.s32.totalorder %s23, 0
      %p109 = por %p107, %p108
      %p110 = scmp.ne.s32.totalorder %s99, %s102
      %p111 = scmp.eq.s32.totalorder %s28, 1
      %p112 = por %p110, %p111
      %p113 = scmp.ne.s32.totalorder %s102, %s103
      %p114 = scmp.eq.s32.totalorder %s28, 0
      %p115 = por %p113, %p114
      %p116 = scmp.ne.s32.totalorder %s102, %s103
      %p117 = scmp.eq.s32.totalorder %s29, 1
      %p118 = por %p116, %p117
      %p120 = scmp.ne.s32.totalorder %s103, %s119
      %p121 = scmp.eq.s32.totalorder %s29, 0
      %p122 = por %p120, %p121
      %s123 = ssub.s32 %s30, %s42
      %s124 = ssub.s32 %s31, %s38
      %s125 = sor.u32 %s123, %s124
      %p126 = scmp.eq.s32.totalorder %s125, 0
      %s128 = sadd.s32 %s127, 1
      %s129 = scalar_select %p126, %s127, %s128
      %p132 = pneg %p126
      %p133 = scmp.eq.s32.totalorder %s23, 1
      %p134 = por %p132, %p133
      %p135 = scmp.ne.s32.totalorder %s127, %s130
      %p136 = scmp.eq.s32.totalorder %s23, 0
      %p137 = por %p135, %p136
      %p138 = scmp.ne.s32.totalorder %s127, %s130
      %p139 = scmp.eq.s32.totalorder %s28, 1
      %p140 = por %p138, %p139
      %p141 = scmp.ne.s32.totalorder %s130, %s131
      %p142 = scmp.eq.s32.totalorder %s28, 0
      %p143 = por %p141, %p142
      %p144 = scmp.ne.s32.totalorder %s130, %s131
      %p145 = scmp.eq.s32.totalorder %s29, 1
      %p146 = por %p144, %p145
      %p148 = scmp.ne.s32.totalorder %s131, %s147
      %p149 = scmp.eq.s32.totalorder %s29, 0
      %p150 = por %p148, %p149
      %s151 = ssub.s32 %s30, %s42
      %s152 = ssub.s32 %s31, %s38
      %s153 = sor.u32 %s151, %s152
      %p154 = scmp.eq.s32.totalorder %s153, 0
      %s156 = sadd.s32 %s155, 1
      %s157 = scalar_select %p154, %s155, %s156
      %p160 = pneg %p154
      %p161 = scmp.eq.s32.totalorder %s23, 1
      %p162 = por %p160, %p161
      %p163 = scmp.ne.s32.totalorder %s155, %s158
      %p164 = scmp.eq.s32.totalorder %s23, 0
      %p165 = por %p163, %p164
      %p166 = scmp.ne.s32.totalorder %s155, %s158
      %p167 = scmp.eq.s32.totalorder %s28, 1
      %p168 = por %p166, %p167
      %p169 = scmp.ne.s32.totalorder %s158, %s159
      %p170 = scmp.eq.s32.totalorder %s28, 0
      %p171 = por %p169, %p170
      %p172 = scmp.ne.s32.totalorder %s158, %s159
      %p173 = scmp.eq.s32.totalorder %s29, 1
      %p174 = por %p172, %p173
      %p176 = scmp.ne.s32.totalorder %s159, %s175
      %p177 = scmp.eq.s32.totalorder %s29, 0
      %p178 = por %p176, %p177
      %p179 = scmp.le.s32.totalorder 1, %s23
      %p180 = scmp.lt.s32.totalorder %s23, 3
      %p181 = pnand %p179, %p180
      %p182 = pneg %p181
      // Predicated region
      $region9: #{tpu_custom_call.1} parent=5 // pred_check
        _
      $region10: #{tpu_custom_call.1} parent=5 // pred_check_branch
        %184 = sbr.rel (%p181) target = $region12
      $region11: #{tpu_custom_call.1} parent=5 // pred_region
        %s185 = ssub.s32 %s23, 1
      $region12: #{tpu_custom_call.1} parent=5 // pred_fallthru
        _
      %p186 = scmp.lt.s32.totalorder %s23, 2
      // Predicated region
      $region13: #{tpu_custom_call.1} parent=5 // pred_check
        %p187 = pneg %p186
      $region14: #{tpu_custom_call.1} parent=5 // pred_check_branch
        %189 = sbr.rel (%p187) target = $region16
      $region15: #{tpu_custom_call.1} parent=5 // pred_region
        // Predicated region
        $region17: #{tpu_custom_call.1} parent=15 // pred_check
          %p190 = pneg %p57
        $region18: #{tpu_custom_call.1} parent=15 // pred_check_branch
          %192 = sbr.rel (%p190) target = $region20
        $region19: #{tpu_custom_call.1} parent=15 // pred_region
          %s193 = sand.u32 %s47, 1
          %s194 = scalar_lea.sflag [#allocation3], %s193
          %s195 = sand.u32 %s47, 1
          %s196 = smul.addr %s195, 128
          %s197 = scalar_lea.vmem [#allocation2], %s196
          %s198 = smul.u32 16, %s31
          %200 = vsyncadd %s194, 0
          %s201 = smul.addr %s30, 16
          %s202 = sadd.s32 %s198, %s201
          %s203 = smul.addr %s202, 8
          %s204 = scalar_lea.hbm %s0, %s203
          %s205 = sshll.u32 %s204, 4
          %s206 = int_to_ptr.hbm [resolvable:$true] %s205
          %s207 = sshll.u32 %s197, 4
          %s208 = int_to_ptr.vmem [resolvable:$true] %s207
          %213 = dma.hbm_to_vmem [thread:$0]  %s206, 2048, %s208, %s194, 128, 128, 8
        $region20: #{tpu_custom_call.1} parent=15 // pred_fallthru
          _
        // Predicated region
        $region21: #{tpu_custom_call.1} parent=15 // pred_check
          %p214 = pneg %p83
        $region22: #{tpu_custom_call.1} parent=15 // pred_check_branch
          %216 = sbr.rel (%p214) target = $region24
        $region23: #{tpu_custom_call.1} parent=15 // pred_region
          %s217 = sand.u32 %s23, 1
          %s218 = scalar_lea.sflag [#allocation6], %s217
          %s219 = sand.u32 %s73, 1
          %s220 = smul.addr %s219, 128
          %s221 = scalar_lea.vmem [#allocation5], %s220
          %223 = vsyncadd %s218, 0
          %s224 = smul.addr %s30, 16
          %s225 = smul.addr %s224, 8
          %s226 = scalar_lea.hbm %s1, %s225
          %s227 = sshll.u32 %s226, 4
          %s228 = int_to_ptr.hbm [resolvable:$true] %s227
          %s229 = sshll.u32 %s221, 4
          %s230 = int_to_ptr.vmem [resolvable:$true] %s229
          %235 = dma.hbm_to_vmem [thread:$0]  %s228, 2048, %s230, %s218, 128, 128, 8
        $region24: #{tpu_custom_call.1} parent=15 // pred_fallthru
          _
        // Predicated region
        $region25: #{tpu_custom_call.1} parent=15 // pred_check
          %p236 = pneg %p109
        $region26: #{tpu_custom_call.1} parent=15 // pred_check_branch
          %238 = sbr.rel (%p236) target = $region28
        $region27: #{tpu_custom_call.1} parent=15 // pred_region
          %s239 = sand.u32 %s23, 1
          %s240 = scalar_lea.sflag [#allocation6], %s239
          %s241 = sand.u32 %s99, 1
          %s242 = smul.addr %s241, 128
          %s243 = scalar_lea.vmem [#allocation7], %s242
          %245 = vsyncadd %s240, 0
          %s246 = smul.addr %s30, 16
          %s247 = smul.addr %s246, 8
          %s248 = scalar_lea.hbm %s2, %s247
          %s249 = sshll.u32 %s248, 4
          %s250 = int_to_ptr.hbm [resolvable:$true] %s249
          %s251 = sshll.u32 %s243, 4
          %s252 = int_to_ptr.vmem [resolvable:$true] %s251
          %257 = dma.hbm_to_vmem [thread:$0]  %s250, 2048, %s252, %s240, 128, 128, 8
        $region28: #{tpu_custom_call.1} parent=15 // pred_fallthru
          _
      $region16: #{tpu_custom_call.1} parent=5 // pred_fallthru
        _
      %p258 = scmp.le.s32.totalorder 1, %s23
      %p259 = scmp.lt.s32.totalorder %s23, 3
      %p260 = pnand %p258, %p259
      %p261 = pneg %p260
      // Predicated region
      $region29: #{tpu_custom_call.1} parent=5 // pred_check
        _
      $region30: #{tpu_custom_call.1} parent=5 // pred_check_branch
        %263 = sbr.rel (%p260) target = $region32
      $region31: #{tpu_custom_call.1} parent=5 // pred_region
        %s264 = ssub.s32 %s23, 1
        %s265 = sand.u32 %s50, 1
        %s266 = scalar_lea.sflag [#allocation3], %s265
        %s267 = sand.u32 %s50, 1
        %s268 = smul.addr %s267, 128
        %s269 = scalar_lea.vmem [#allocation2], %s268
        // Predicated region
        $region33: #{tpu_custom_call.1} parent=31 // pred_check
          %p270 = pneg %p63
        $region34: #{tpu_custom_call.1} parent=31 // pred_check_branch
          %272 = sbr.rel (%p270) target = $region36
        $region35: #{tpu_custom_call.1} parent=31 // pred_region
          %274 = dma.done %s266, 2048
        $region36: #{tpu_custom_call.1} parent=31 // pred_fallthru
          _
        %s275 = sand.u32 %s28, 1
        %s276 = scalar_lea.sflag [#allocation6], %s275
        %s277 = sand.u32 %s76, 1
        %s278 = smul.addr %s277, 128
        %s279 = scalar_lea.vmem [#allocation5], %s278
        // Predicated region
        $region37: #{tpu_custom_call.1} parent=31 // pred_check
          %p280 = pneg %p89
        $region38: #{tpu_custom_call.1} parent=31 // pred_check_branch
          %282 = sbr.rel (%p280) target = $region40
        $region39: #{tpu_custom_call.1} parent=31 // pred_region
          %284 = dma.done %s276, 2048
        $region40: #{tpu_custom_call.1} parent=31 // pred_fallthru
          _
        %s285 = sand.u32 %s28, 1
        %s286 = scalar_lea.sflag [#allocation6], %s285
        %s287 = sand.u32 %s102, 1
        %s288 = smul.addr %s287, 128
        %s289 = scalar_lea.vmem [#allocation7], %s288
        // Predicated region
        $region41: #{tpu_custom_call.1} parent=31 // pred_check
          %p290 = pneg %p115
        $region42: #{tpu_custom_call.1} parent=31 // pred_check_branch
          %292 = sbr.rel (%p290) target = $region44
        $region43: #{tpu_custom_call.1} parent=31 // pred_region
          %294 = dma.done %s286, 2048
        $region44: #{tpu_custom_call.1} parent=31 // pred_fallthru
          _
        %s295 = sand.u32 %s50, 1
        %s296 = scalar_lea.sflag [#allocation3], %s295
        %s297 = sand.u32 %s50, 1
        %s298 = smul.addr %s297, 128
        %s299 = scalar_lea.vmem [#allocation2], %s298
        %p300 = pneg %p63
        %p301 = pneg %p60
        %s302 = sand.u32 %s28, 1
        %s303 = scalar_lea.sflag [#allocation6], %s302
        %s304 = sand.u32 %s76, 1
        %s305 = smul.addr %s304, 128
        %s306 = scalar_lea.vmem [#allocation5], %s305
        %p307 = pneg %p89
        %p308 = pneg %p86
        %s309 = sand.u32 %s28, 1
        %s310 = scalar_lea.sflag [#allocation6], %s309
        %s311 = sand.u32 %s102, 1
        %s312 = smul.addr %s311, 128
        %s313 = scalar_lea.vmem [#allocation7], %s312
        %p314 = pneg %p115
        %p315 = pneg %p112
        %p316 = pneg %p143
        %p317 = pneg %p140
        %s318 = sand.u32 %s130, 1
        %s319 = scalar_lea.sflag [#allocation4], %s318
        %s320 = sand.u32 %s130, 1
        %s321 = smul.addr %s320, 128
        %s322 = scalar_lea.vmem [#allocation8], %s321
        %p323 = pneg %p171
        %p324 = pneg %p168
        %s325 = sand.u32 %s158, 1
        %s326 = scalar_lea.sflag [#allocation10], %s325
        %s327 = sand.u32 %s158, 1
        %s328 = smul.addr %s327, 128
        %s329 = scalar_lea.vmem [#allocation9], %s328
        %s330 = smul.u32 16, %s33
        %s331 = smul.u32 16, %s33
        %s332 = smul.u32 16, %s33
        %v333 = vld [vmem:[%s269] sm:$0xff]
        %v334 = vld [vmem:[%s269 + $0x8] sm:$0xff]
        %v335 = vld [vmem:[%s269 + $0x10] sm:$0xff]
        %v336 = vld [vmem:[%s269 + $0x18] sm:$0xff]
        %v337 = vld [vmem:[%s269 + $0x20] sm:$0xff]
        %v338 = vld [vmem:[%s269 + $0x28] sm:$0xff]
        %v339 = vld [vmem:[%s269 + $0x30] sm:$0xff]
        %v340 = vld [vmem:[%s269 + $0x38] sm:$0xff]
        %v341 = vld [vmem:[%s269 + $0x40] sm:$0xff]
        %v342 = vld [vmem:[%s269 + $0x48] sm:$0xff]
        %v343 = vld [vmem:[%s269 + $0x50] sm:$0xff]
        %v344 = vld [vmem:[%s269 + $0x58] sm:$0xff]
        %v345 = vld [vmem:[%s269 + $0x60] sm:$0xff]
        %v346 = vld [vmem:[%s269 + $0x68] sm:$0xff]
        %v347 = vld [vmem:[%s269 + $0x70] sm:$0xff]
        %v348 = vld [vmem:[%s269 + $0x78] sm:$0xff]
        %v349 = vld [vmem:[%s279] sm:$0xff]
        %v350 = vld [vmem:[%s279 + $0x8] sm:$0xff]
        %v351 = vld [vmem:[%s279 + $0x10] sm:$0xff]
        %v352 = vld [vmem:[%s279 + $0x18] sm:$0xff]
        %v353 = vld [vmem:[%s279 + $0x20] sm:$0xff]
        %v354 = vld [vmem:[%s279 + $0x28] sm:$0xff]
        %v355 = vld [vmem:[%s279 + $0x30] sm:$0xff]
        %v356 = vld [vmem:[%s279 + $0x38] sm:$0xff]
        %v357 = vld [vmem:[%s279 + $0x40] sm:$0xff]
        %v358 = vld [vmem:[%s279 + $0x48] sm:$0xff]
        %v359 = vld [vmem:[%s279 + $0x50] sm:$0xff]
        %v360 = vld [vmem:[%s279 + $0x58] sm:$0xff]
        %v361 = vld [vmem:[%s279 + $0x60] sm:$0xff]
        %v362 = vld [vmem:[%s279 + $0x68] sm:$0xff]
        %v363 = vld [vmem:[%s279 + $0x70] sm:$0xff]
        %v364 = vld [vmem:[%s279 + $0x78] sm:$0xff]
        %v365 = vld [vmem:[%s289] sm:$0xff]
        %v366 = vld [vmem:[%s289 + $0x8] sm:$0xff]
        %v367 = vld [vmem:[%s289 + $0x10] sm:$0xff]
        %v368 = vld [vmem:[%s289 + $0x18] sm:$0xff]
        %v369 = vld [vmem:[%s289 + $0x20] sm:$0xff]
        %v370 = vld [vmem:[%s289 + $0x28] sm:$0xff]
        %v371 = vld [vmem:[%s289 + $0x30] sm:$0xff]
        %v372 = vld [vmem:[%s289 + $0x38] sm:$0xff]
        %v373 = vld [vmem:[%s289 + $0x40] sm:$0xff]
        %v374 = vld [vmem:[%s289 + $0x48] sm:$0xff]
        %v375 = vld [vmem:[%s289 + $0x50] sm:$0xff]
        %v376 = vld [vmem:[%s289 + $0x58] sm:$0xff]
        %v377 = vld [vmem:[%s289 + $0x60] sm:$0xff]
        %v378 = vld [vmem:[%s289 + $0x68] sm:$0xff]
        %v379 = vld [vmem:[%s289 + $0x70] sm:$0xff]
        %v380 = vld [vmem:[%s289 + $0x78] sm:$0xff]
        %381 = vmatpush.xpose.msra.mxu0 %v364
        %382 = vmatpush.xpose.msra.mxu0 %v363
        %383 = vmatpush.xpose.msra.mxu0 %v362
        %384 = vmatpush.xpose.msra.mxu0 %v361
        %385 = vmatpush.xpose.msra.mxu0 %v360
        %386 = vmatpush.xpose.msra.mxu0 %v359
        %387 = vmatpush.xpose.msra.mxu0 %v358
        %388 = vmatpush.xpose.msra.mxu0 %v357
        %389 = vmatpush.xpose.msra.mxu0 %v356
        %390 = vmatpush.xpose.msra.mxu0 %v355
        %391 = vmatpush.xpose.msra.mxu0 %v354
        %392 = vmatpush.xpose.msra.mxu0 %v353
        %393 = vmatpush.xpose.msra.mxu0 %v352
        %394 = vmatpush.xpose.msra.mxu0 %v351
        %395 = vmatpush.xpose.msra.mxu0 %v350
        %396 = vmatpush.xpose.msra.mxu0 %v349
        %397 = vmatmul.f32.gmra.mxu0 %v333
        %v398 = vpop.f32.mrf.mxu0
        %v399 = vadd.f32 0.0, %v398
        %400 = vmatmul.f32.gmra.mxu0 %v334
        %v401 = vpop.f32.mrf.mxu0
        %v402 = vadd.f32 0.0, %v401
        %403 = vmatmul.f32.gmra.mxu0 %v335
        %v404 = vpop.f32.mrf.mxu0
        %v405 = vadd.f32 0.0, %v404
        %406 = vmatmul.f32.gmra.mxu0 %v336
        %v407 = vpop.f32.mrf.mxu0
        %v408 = vadd.f32 0.0, %v407
        %409 = vmatmul.f32.gmra.mxu0 %v337
        %v410 = vpop.f32.mrf.mxu0
        %v411 = vadd.f32 0.0, %v410
        %412 = vmatmul.f32.gmra.mxu0 %v338
        %v413 = vpop.f32.mrf.mxu0
        %v414 = vadd.f32 0.0, %v413
        %415 = vmatmul.f32.gmra.mxu0 %v339
        %v416 = vpop.f32.mrf.mxu0
        %v417 = vadd.f32 0.0, %v416
        %418 = vmatmul.f32.gmra.mxu0 %v340
        %v419 = vpop.f32.mrf.mxu0
        %v420 = vadd.f32 0.0, %v419
        %421 = vmatmul.f32.gmra.mxu0 %v341
        %v422 = vpop.f32.mrf.mxu0
        %v423 = vadd.f32 0.0, %v422
        %424 = vmatmul.f32.gmra.mxu0 %v342
        %v425 = vpop.f32.mrf.mxu0
        %v426 = vadd.f32 0.0, %v425
        %427 = vmatmul.f32.gmra.mxu0 %v343
        %v428 = vpop.f32.mrf.mxu0
        %v429 = vadd.f32 0.0, %v428
        %430 = vmatmul.f32.gmra.mxu0 %v344
        %v431 = vpop.f32.mrf.mxu0
        %v432 = vadd.f32 0.0, %v431
        %433 = vmatmul.f32.gmra.mxu0 %v345
        %v434 = vpop.f32.mrf.mxu0
        %v435 = vadd.f32 0.0, %v434
        %436 = vmatmul.f32.gmra.mxu0 %v346
        %v437 = vpop.f32.mrf.mxu0
        %v438 = vadd.f32 0.0, %v437
        %439 = vmatmul.f32.gmra.mxu0 %v347
        %v440 = vpop.f32.mrf.mxu0
        %v441 = vadd.f32 0.0, %v440
        %442 = vmatmul.f32.gmra.mxu0 %v348
        %v443 = vpop.f32.mrf.mxu0
        %v444 = vadd.f32 0.0, %v443
        %445 = vdwg.mxu0
        %v446 = vmul.f32 %v399, 0.088388346
        %v447 = vmul.f32 %v402, 0.088388346
        %v448 = vmul.f32 %v405, 0.088388346
        %v449 = vmul.f32 %v408, 0.088388346
        %v450 = vmul.f32 %v411, 0.088388346
        %v451 = vmul.f32 %v414, 0.088388346
        %v452 = vmul.f32 %v417, 0.088388346
        %v453 = vmul.f32 %v420, 0.088388346
        %v454 = vmul.f32 %v423, 0.088388346
        %v455 = vmul.f32 %v426, 0.088388346
        %v456 = vmul.f32 %v429, 0.088388346
        %v457 = vmul.f32 %v432, 0.088388346
        %v458 = vmul.f32 %v435, 0.088388346
        %v459 = vmul.f32 %v438, 0.088388346
        %v460 = vmul.f32 %v441, 0.088388346
        %v461 = vmul.f32 %v444, 0.088388346
        %462 = vmax.xlane.f32.xlu0 %v446
        %v463 = vpop.xlane.xlu0 %462
        %464 = vmax.xlane.f32.xlu0 %v447
        %v465 = vpop.xlane.xlu0 %464
        %466 = vmax.xlane.f32.xlu0 %v448
        %v467 = vpop.xlane.xlu0 %466
        %468 = vmax.xlane.f32.xlu0 %v449
        %v469 = vpop.xlane.xlu0 %468
        %470 = vmax.xlane.f32.xlu0 %v450
        %v471 = vpop.xlane.xlu0 %470
        %472 = vmax.xlane.f32.xlu0 %v451
        %v473 = vpop.xlane.xlu0 %472
        %474 = vmax.xlane.f32.xlu0 %v452
        %v475 = vpop.xlane.xlu0 %474
        %476 = vmax.xlane.f32.xlu0 %v453
        %v477 = vpop.xlane.xlu0 %476
        %478 = vmax.xlane.f32.xlu0 %v454
        %v479 = vpop.xlane.xlu0 %478
        %480 = vmax.xlane.f32.xlu0 %v455
        %v481 = vpop.xlane.xlu0 %480
        %482 = vmax.xlane.f32.xlu0 %v456
        %v483 = vpop.xlane.xlu0 %482
        %484 = vmax.xlane.f32.xlu0 %v457
        %v485 = vpop.xlane.xlu0 %484
        %486 = vmax.xlane.f32.xlu0 %v458
        %v487 = vpop.xlane.xlu0 %486
        %488 = vmax.xlane.f32.xlu0 %v459
        %v489 = vpop.xlane.xlu0 %488
        %490 = vmax.xlane.f32.xlu0 %v460
        %v491 = vpop.xlane.xlu0 %490
        %492 = vmax.xlane.f32.xlu0 %v461
        %v493 = vpop.xlane.xlu0 %492
        %v494 = vsub.f32 %v446, %v463
        %v495 = vsub.f32 %v447, %v465
        %v496 = vsub.f32 %v448, %v467
        %v497 = vsub.f32 %v449, %v469
        %v498 = vsub.f32 %v450, %v471
        %v499 = vsub.f32 %v451, %v473
        %v500 = vsub.f32 %v452, %v475
        %v501 = vsub.f32 %v453, %v477
        %v502 = vsub.f32 %v454, %v479
        %v503 = vsub.f32 %v455, %v481
        %v504 = vsub.f32 %v456, %v483
        %v505 = vsub.f32 %v457, %v485
        %v506 = vsub.f32 %v458, %v487
        %v507 = vsub.f32 %v459, %v489
        %v508 = vsub.f32 %v460, %v491
        %v509 = vsub.f32 %v461, %v493
        %v510 = vmul.f32 %v494, 1.442695
        %v511 = vpow.pop %v510
        %v512 = vmul.f32 %v495, 1.442695
        %v513 = vpow.pop %v512
        %v514 = vmul.f32 %v496, 1.442695
        %v515 = vpow.pop %v514
        %v516 = vmul.f32 %v497, 1.442695
        %v517 = vpow.pop %v516
        %v518 = vmul.f32 %v498, 1.442695
        %v519 = vpow.pop %v518
        %v520 = vmul.f32 %v499, 1.442695
        %v521 = vpow.pop %v520
        %v522 = vmul.f32 %v500, 1.442695
        %v523 = vpow.pop %v522
        %v524 = vmul.f32 %v501, 1.442695
        %v525 = vpow.pop %v524
        %v526 = vmul.f32 %v502, 1.442695
        %v527 = vpow.pop %v526
        %v528 = vmul.f32 %v503, 1.442695
        %v529 = vpow.pop %v528
        %v530 = vmul.f32 %v504, 1.442695
        %v531 = vpow.pop %v530
        %v532 = vmul.f32 %v505, 1.442695
        %v533 = vpow.pop %v532
        %v534 = vmul.f32 %v506, 1.442695
        %v535 = vpow.pop %v534
        %v536 = vmul.f32 %v507, 1.442695
        %v537 = vpow.pop %v536
        %v538 = vmul.f32 %v508, 1.442695
        %v539 = vpow.pop %v538
        %v540 = vmul.f32 %v509, 1.442695
        %v541 = vpow.pop %v540
        %542 = vadd.xlane.f32.xlu0 %v511
        %v543 = vpop.xlane.xlu0 %542
        %544 = vadd.xlane.f32.xlu0 %v513
        %v545 = vpop.xlane.xlu0 %544
        %546 = vadd.xlane.f32.xlu0 %v515
        %v547 = vpop.xlane.xlu0 %546
        %548 = vadd.xlane.f32.xlu0 %v517
        %v549 = vpop.xlane.xlu0 %548
        %550 = vadd.xlane.f32.xlu0 %v519
        %v551 = vpop.xlane.xlu0 %550
        %552 = vadd.xlane.f32.xlu0 %v521
        %v553 = vpop.xlane.xlu0 %552
        %554 = vadd.xlane.f32.xlu0 %v523
        %v555 = vpop.xlane.xlu0 %554
        %556 = vadd.xlane.f32.xlu0 %v525
        %v557 = vpop.xlane.xlu0 %556
        %558 = vadd.xlane.f32.xlu0 %v527
        %v559 = vpop.xlane.xlu0 %558
        %560 = vadd.xlane.f32.xlu0 %v529
        %v561 = vpop.xlane.xlu0 %560
        %562 = vadd.xlane.f32.xlu0 %v531
        %v563 = vpop.xlane.xlu0 %562
        %564 = vadd.xlane.f32.xlu0 %v533
        %v565 = vpop.xlane.xlu0 %564
        %566 = vadd.xlane.f32.xlu0 %v535
        %v567 = vpop.xlane.xlu0 %566
        %568 = vadd.xlane.f32.xlu0 %v537
        %v569 = vpop.xlane.xlu0 %568
        %570 = vadd.xlane.f32.xlu0 %v539
        %v571 = vpop.xlane.xlu0 %570
        %572 = vadd.xlane.f32.xlu0 %v541
        %v573 = vpop.xlane.xlu0 %572
        %v574 = vrcp.pop %v543
        %v575 = vmul.f32 %v543, %v574
        %v576 = vsub.f32 1.0, %v575
        %v577 = vmul.f32 %v574, %v576
        %v578 = vadd.f32 %v574, %v577
        %vm579 = vweird.f32 %v543
        %vm580 = vweird.f32 %v574
        %vm581 = vmor %vm579, %vm580
        %v582 = vsel %vm581, %v574, %v578
        %v583 = vand.u32 2147483647, %v543
        %vm584 = vcmp.eq.f32.partialorder %v583, 8.507059e+37
        %v585 = vand.u32 %v543, 2147483648
        %v586 = vor.u32 1.1754944e-38, %v585
        %v587 = vsel %vm584, %v586, %v582
        %v588 = vmul.f32 %v511, %v587
        %v589 = vrcp.pop %v545
        %v590 = vmul.f32 %v545, %v589
        %v591 = vsub.f32 1.0, %v590
        %v592 = vmul.f32 %v589, %v591
        %v593 = vadd.f32 %v589, %v592
        %vm594 = vweird.f32 %v545
        %vm595 = vweird.f32 %v589
        %vm596 = vmor %vm594, %vm595
        %v597 = vsel %vm596, %v589, %v593
        %v598 = vand.u32 2147483647, %v545
        %vm599 = vcmp.eq.f32.partialorder %v598, 8.507059e+37
        %v600 = vand.u32 %v545, 2147483648
        %v601 = vor.u32 1.1754944e-38, %v600
        %v602 = vsel %vm599, %v601, %v597
        %v603 = vmul.f32 %v513, %v602
        %v604 = vrcp.pop %v547
        %v605 = vmul.f32 %v547, %v604
        %v606 = vsub.f32 1.0, %v605
        %v607 = vmul.f32 %v604, %v606
        %v608 = vadd.f32 %v604, %v607
        %vm609 = vweird.f32 %v547
        %vm610 = vweird.f32 %v604
        %vm611 = vmor %vm609, %vm610
        %v612 = vsel %vm611, %v604, %v608
        %v613 = vand.u32 2147483647, %v547
        %vm614 = vcmp.eq.f32.partialorder %v613, 8.507059e+37
        %v615 = vand.u32 %v547, 2147483648
        %v616 = vor.u32 1.1754944e-38, %v615
        %v617 = vsel %vm614, %v616, %v612
        %v618 = vmul.f32 %v515, %v617
        %v619 = vrcp.pop %v549
        %v620 = vmul.f32 %v549, %v619
        %v621 = vsub.f32 1.0, %v620
        %v622 = vmul.f32 %v619, %v621
        %v623 = vadd.f32 %v619, %v622
        %vm624 = vweird.f32 %v549
        %vm625 = vweird.f32 %v619
        %vm626 = vmor %vm624, %vm625
        %v627 = vsel %vm626, %v619, %v623
        %v628 = vand.u32 2147483647, %v549
        %vm629 = vcmp.eq.f32.partialorder %v628, 8.507059e+37
        %v630 = vand.u32 %v549, 2147483648
        %v631 = vor.u32 1.1754944e-38, %v630
        %v632 = vsel %vm629, %v631, %v627
        %v633 = vmul.f32 %v517, %v632
        %v634 = vrcp.pop %v551
        %v635 = vmul.f32 %v551, %v634
        %v636 = vsub.f32 1.0, %v635
        %v637 = vmul.f32 %v634, %v636
        %v638 = vadd.f32 %v634, %v637
        %vm639 = vweird.f32 %v551
        %vm640 = vweird.f32 %v634
        %vm641 = vmor %vm639, %vm640
        %v642 = vsel %vm641, %v634, %v638
        %v643 = vand.u32 2147483647, %v551
        %vm644 = vcmp.eq.f32.partialorder %v643, 8.507059e+37
        %v645 = vand.u32 %v551, 2147483648
        %v646 = vor.u32 1.1754944e-38, %v645
        %v647 = vsel %vm644, %v646, %v642
        %v648 = vmul.f32 %v519, %v647
        %v649 = vrcp.pop %v553
        %v650 = vmul.f32 %v553, %v649
        %v651 = vsub.f32 1.0, %v650
        %v652 = vmul.f32 %v649, %v651
        %v653 = vadd.f32 %v649, %v652
        %vm654 = vweird.f32 %v553
        %vm655 = vweird.f32 %v649
        %vm656 = vmor %vm654, %vm655
        %v657 = vsel %vm656, %v649, %v653
        %v658 = vand.u32 2147483647, %v553
        %vm659 = vcmp.eq.f32.partialorder %v658, 8.507059e+37
        %v660 = vand.u32 %v553, 2147483648
        %v661 = vor.u32 1.1754944e-38, %v660
        %v662 = vsel %vm659, %v661, %v657
        %v663 = vmul.f32 %v521, %v662
        %v664 = vrcp.pop %v555
        %v665 = vmul.f32 %v555, %v664
        %v666 = vsub.f32 1.0, %v665
        %v667 = vmul.f32 %v664, %v666
        %v668 = vadd.f32 %v664, %v667
        %vm669 = vweird.f32 %v555
        %vm670 = vweird.f32 %v664
        %vm671 = vmor %vm669, %vm670
        %v672 = vsel %vm671, %v664, %v668
        %v673 = vand.u32 2147483647, %v555
        %vm674 = vcmp.eq.f32.partialorder %v673, 8.507059e+37
        %v675 = vand.u32 %v555, 2147483648
        %v676 = vor.u32 1.1754944e-38, %v675
        %v677 = vsel %vm674, %v676, %v672
        %v678 = vmul.f32 %v523, %v677
        %v679 = vrcp.pop %v557
        %v680 = vmul.f32 %v557, %v679
        %v681 = vsub.f32 1.0, %v680
        %v682 = vmul.f32 %v679, %v681
        %v683 = vadd.f32 %v679, %v682
        %vm684 = vweird.f32 %v557
        %vm685 = vweird.f32 %v679
        %vm686 = vmor %vm684, %vm685
        %v687 = vsel %vm686, %v679, %v683
        %v688 = vand.u32 2147483647, %v557
        %vm689 = vcmp.eq.f32.partialorder %v688, 8.507059e+37
        %v690 = vand.u32 %v557, 2147483648
        %v691 = vor.u32 1.1754944e-38, %v690
        %v692 = vsel %vm689, %v691, %v687
        %v693 = vmul.f32 %v525, %v692
        %v694 = vrcp.pop %v559
        %v695 = vmul.f32 %v559, %v694
        %v696 = vsub.f32 1.0, %v695
        %v697 = vmul.f32 %v694, %v696
        %v698 = vadd.f32 %v694, %v697
        %vm699 = vweird.f32 %v559
        %vm700 = vweird.f32 %v694
        %vm701 = vmor %vm699, %vm700
        %v702 = vsel %vm701, %v694, %v698
        %v703 = vand.u32 2147483647, %v559
        %vm704 = vcmp.eq.f32.partialorder %v703, 8.507059e+37
        %v705 = vand.u32 %v559, 2147483648
        %v706 = vor.u32 1.1754944e-38, %v705
        %v707 = vsel %vm704, %v706, %v702
        %v708 = vmul.f32 %v527, %v707
        %v709 = vrcp.pop %v561
        %v710 = vmul.f32 %v561, %v709
        %v711 = vsub.f32 1.0, %v710
        %v712 = vmul.f32 %v709, %v711
        %v713 = vadd.f32 %v709, %v712
        %vm714 = vweird.f32 %v561
        %vm715 = vweird.f32 %v709
        %vm716 = vmor %vm714, %vm715
        %v717 = vsel %vm716, %v709, %v713
        %v718 = vand.u32 2147483647, %v561
        %vm719 = vcmp.eq.f32.partialorder %v718, 8.507059e+37
        %v720 = vand.u32 %v561, 2147483648
        %v721 = vor.u32 1.1754944e-38, %v720
        %v722 = vsel %vm719, %v721, %v717
        %v723 = vmul.f32 %v529, %v722
        %v724 = vrcp.pop %v563
        %v725 = vmul.f32 %v563, %v724
        %v726 = vsub.f32 1.0, %v725
        %v727 = vmul.f32 %v724, %v726
        %v728 = vadd.f32 %v724, %v727
        %vm729 = vweird.f32 %v563
        %vm730 = vweird.f32 %v724
        %vm731 = vmor %vm729, %vm730
        %v732 = vsel %vm731, %v724, %v728
        %v733 = vand.u32 2147483647, %v563
        %vm734 = vcmp.eq.f32.partialorder %v733, 8.507059e+37
        %v735 = vand.u32 %v563, 2147483648
        %v736 = vor.u32 1.1754944e-38, %v735
        %v737 = vsel %vm734, %v736, %v732
        %v738 = vmul.f32 %v531, %v737
        %v739 = vrcp.pop %v565
        %v740 = vmul.f32 %v565, %v739
        %v741 = vsub.f32 1.0, %v740
        %v742 = vmul.f32 %v739, %v741
        %v743 = vadd.f32 %v739, %v742
        %vm744 = vweird.f32 %v565
        %vm745 = vweird.f32 %v739
        %vm746 = vmor %vm744, %vm745
        %v747 = vsel %vm746, %v739, %v743
        %v748 = vand.u32 2147483647, %v565
        %vm749 = vcmp.eq.f32.partialorder %v748, 8.507059e+37
        %v750 = vand.u32 %v565, 2147483648
        %v751 = vor.u32 1.1754944e-38, %v750
        %v752 = vsel %vm749, %v751, %v747
        %v753 = vmul.f32 %v533, %v752
        %v754 = vrcp.pop %v567
        %v755 = vmul.f32 %v567, %v754
        %v756 = vsub.f32 1.0, %v755
        %v757 = vmul.f32 %v754, %v756
        %v758 = vadd.f32 %v754, %v757
        %vm759 = vweird.f32 %v567
        %vm760 = vweird.f32 %v754
        %vm761 = vmor %vm759, %vm760
        %v762 = vsel %vm761, %v754, %v758
        %v763 = vand.u32 2147483647, %v567
        %vm764 = vcmp.eq.f32.partialorder %v763, 8.507059e+37
        %v765 = vand.u32 %v567, 2147483648
        %v766 = vor.u32 1.1754944e-38, %v765
        %v767 = vsel %vm764, %v766, %v762
        %v768 = vmul.f32 %v535, %v767
        %v769 = vrcp.pop %v569
        %v770 = vmul.f32 %v569, %v769
        %v771 = vsub.f32 1.0, %v770
        %v772 = vmul.f32 %v769, %v771
        %v773 = vadd.f32 %v769, %v772
        %vm774 = vweird.f32 %v569
        %vm775 = vweird.f32 %v769
        %vm776 = vmor %vm774, %vm775
        %v777 = vsel %vm776, %v769, %v773
        %v778 = vand.u32 2147483647, %v569
        %vm779 = vcmp.eq.f32.partialorder %v778, 8.507059e+37
        %v780 = vand.u32 %v569, 2147483648
        %v781 = vor.u32 1.1754944e-38, %v780
        %v782 = vsel %vm779, %v781, %v777
        %v783 = vmul.f32 %v537, %v782
        %v784 = vrcp.pop %v571
        %v785 = vmul.f32 %v571, %v784
        %v786 = vsub.f32 1.0, %v785
        %v787 = vmul.f32 %v784, %v786
        %v788 = vadd.f32 %v784, %v787
        %vm789 = vweird.f32 %v571
        %vm790 = vweird.f32 %v784
        %vm791 = vmor %vm789, %vm790
        %v792 = vsel %vm791, %v784, %v788
        %v793 = vand.u32 2147483647, %v571
        %vm794 = vcmp.eq.f32.partialorder %v793, 8.507059e+37
        %v795 = vand.u32 %v571, 2147483648
        %v796 = vor.u32 1.1754944e-38, %v795
        %v797 = vsel %vm794, %v796, %v792
        %v798 = vmul.f32 %v539, %v797
        %v799 = vrcp.pop %v573
        %v800 = vmul.f32 %v573, %v799
        %v801 = vsub.f32 1.0, %v800
        %v802 = vmul.f32 %v799, %v801
        %v803 = vadd.f32 %v799, %v802
        %vm804 = vweird.f32 %v573
        %vm805 = vweird.f32 %v799
        %vm806 = vmor %vm804, %vm805
        %v807 = vsel %vm806, %v799, %v803
        %v808 = vand.u32 2147483647, %v573
        %vm809 = vcmp.eq.f32.partialorder %v808, 8.507059e+37
        %v810 = vand.u32 %v573, 2147483648
        %v811 = vor.u32 1.1754944e-38, %v810
        %v812 = vsel %vm809, %v811, %v807
        %v813 = vmul.f32 %v541, %v812
        %814 = vst [vmem:[%s329] sm:$0xff] %v588
        %815 = vst [vmem:[%s329 + $0x8] sm:$0xff] %v603
        %816 = vst [vmem:[%s329 + $0x10] sm:$0xff] %v618
        %817 = vst [vmem:[%s329 + $0x18] sm:$0xff] %v633
        %818 = vst [vmem:[%s329 + $0x20] sm:$0xff] %v648
        %819 = vst [vmem:[%s329 + $0x28] sm:$0xff] %v663
        %820 = vst [vmem:[%s329 + $0x30] sm:$0xff] %v678
        %821 = vst [vmem:[%s329 + $0x38] sm:$0xff] %v693
        %822 = vst [vmem:[%s329 + $0x40] sm:$0xff] %v708
        %823 = vst [vmem:[%s329 + $0x48] sm:$0xff] %v723
        %824 = vst [vmem:[%s329 + $0x50] sm:$0xff] %v738
        %825 = vst [vmem:[%s329 + $0x58] sm:$0xff] %v753
        %826 = vst [vmem:[%s329 + $0x60] sm:$0xff] %v768
        %827 = vst [vmem:[%s329 + $0x68] sm:$0xff] %v783
        %828 = vst [vmem:[%s329 + $0x70] sm:$0xff] %v798
        %829 = vst [vmem:[%s329 + $0x78] sm:$0xff] %v813
        %830 = vmatpush.msra.mxu0 %v380
        %831 = vmatpush.msra.mxu0 %v379
        %832 = vmatpush.msra.mxu0 %v378
        %833 = vmatpush.msra.mxu0 %v377
        %834 = vmatpush.msra.mxu0 %v376
        %835 = vmatpush.msra.mxu0 %v375
        %836 = vmatpush.msra.mxu0 %v374
        %837 = vmatpush.msra.mxu0 %v373
        %838 = vmatpush.msra.mxu0 %v372
        %839 = vmatpush.msra.mxu0 %v371
        %840 = vmatpush.msra.mxu0 %v370
        %841 = vmatpush.msra.mxu0 %v369
        %842 = vmatpush.msra.mxu0 %v368
        %843 = vmatpush.msra.mxu0 %v367
        %844 = vmatpush.msra.mxu0 %v366
        %845 = vmatpush.msra.mxu0 %v365
        %846 = vmatmul.f32.gmra.mxu0 %v588
        %v847 = vpop.f32.mrf.mxu0
        %v848 = vadd.f32 0.0, %v847
        %849 = vmatmul.f32.gmra.mxu0 %v603
        %v850 = vpop.f32.mrf.mxu0
        %v851 = vadd.f32 0.0, %v850
        %852 = vmatmul.f32.gmra.mxu0 %v618
        %v853 = vpop.f32.mrf.mxu0
        %v854 = vadd.f32 0.0, %v853
        %855 = vmatmul.f32.gmra.mxu0 %v633
        %v856 = vpop.f32.mrf.mxu0
        %v857 = vadd.f32 0.0, %v856
        %858 = vmatmul.f32.gmra.mxu0 %v648
        %v859 = vpop.f32.mrf.mxu0
        %v860 = vadd.f32 0.0, %v859
        %861 = vmatmul.f32.gmra.mxu0 %v663
        %v862 = vpop.f32.mrf.mxu0
        %v863 = vadd.f32 0.0, %v862
        %864 = vmatmul.f32.gmra.mxu0 %v678
        %v865 = vpop.f32.mrf.mxu0
        %v866 = vadd.f32 0.0, %v865
        %867 = vmatmul.f32.gmra.mxu0 %v693
        %v868 = vpop.f32.mrf.mxu0
        %v869 = vadd.f32 0.0, %v868
        %870 = vmatmul.f32.gmra.mxu0 %v708
        %v871 = vpop.f32.mrf.mxu0
        %v872 = vadd.f32 0.0, %v871
        %873 = vmatmul.f32.gmra.mxu0 %v723
        %v874 = vpop.f32.mrf.mxu0
        %v875 = vadd.f32 0.0, %v874
        %876 = vmatmul.f32.gmra.mxu0 %v738
        %v877 = vpop.f32.mrf.mxu0
        %v878 = vadd.f32 0.0, %v877
        %879 = vmatmul.f32.gmra.mxu0 %v753
        %v880 = vpop.f32.mrf.mxu0
        %v881 = vadd.f32 0.0, %v880
        %882 = vmatmul.f32.gmra.mxu0 %v768
        %v883 = vpop.f32.mrf.mxu0
        %v884 = vadd.f32 0.0, %v883
        %885 = vmatmul.f32.gmra.mxu0 %v783
        %v886 = vpop.f32.mrf.mxu0
        %v887 = vadd.f32 0.0, %v886
        %888 = vmatmul.f32.gmra.mxu0 %v798
        %v889 = vpop.f32.mrf.mxu0
        %v890 = vadd.f32 0.0, %v889
        %891 = vmatmul.f32.gmra.mxu0 %v813
        %v892 = vpop.f32.mrf.mxu0
        %v893 = vadd.f32 0.0, %v892
        %894 = vdwg.mxu0
        %895 = vst [vmem:[%s322] sm:$0xff] %v848
        %896 = vst [vmem:[%s322 + $0x8] sm:$0xff] %v851
        %897 = vst [vmem:[%s322 + $0x10] sm:$0xff] %v854
        %898 = vst [vmem:[%s322 + $0x18] sm:$0xff] %v857
        %899 = vst [vmem:[%s322 + $0x20] sm:$0xff] %v860
        %900 = vst [vmem:[%s322 + $0x28] sm:$0xff] %v863
        %901 = vst [vmem:[%s322 + $0x30] sm:$0xff] %v866
        %902 = vst [vmem:[%s322 + $0x38] sm:$0xff] %v869
        %903 = vst [vmem:[%s322 + $0x40] sm:$0xff] %v872
        %904 = vst [vmem:[%s322 + $0x48] sm:$0xff] %v875
        %905 = vst [vmem:[%s322 + $0x50] sm:$0xff] %v878
        %906 = vst [vmem:[%s322 + $0x58] sm:$0xff] %v881
        %907 = vst [vmem:[%s322 + $0x60] sm:$0xff] %v884
        %908 = vst [vmem:[%s322 + $0x68] sm:$0xff] %v887
        %909 = vst [vmem:[%s322 + $0x70] sm:$0xff] %v890
        %910 = vst [vmem:[%s322 + $0x78] sm:$0xff] %v893
        %s911 = sand.u32 %s130, 1
        %s912 = scalar_lea.sflag [#allocation4], %s911
        %s913 = sand.u32 %s130, 1
        %s914 = smul.addr %s913, 128
        %s915 = scalar_lea.vmem [#allocation8], %s914
        %s916 = sand.u32 %s158, 1
        %s917 = scalar_lea.sflag [#allocation10], %s916
        %s918 = sand.u32 %s158, 1
        %s919 = smul.addr %s918, 128
        %s920 = scalar_lea.vmem [#allocation9], %s919
        // Predicated region
        $region45: #{tpu_custom_call.1} parent=31 // pred_check
          %p921 = pneg %p140
        $region46: #{tpu_custom_call.1} parent=31 // pred_check_branch
          %923 = sbr.rel (%p921) target = $region48
        $region47: #{tpu_custom_call.1} parent=31 // pred_region
          %s924 = smul.u32 16, %s33
          %926 = vsyncadd %s912, 0
          %s927 = smul.addr %s32, 16
          %s928 = sadd.s32 %s924, %s927
          %s929 = smul.addr %s928, 8
          %s930 = scalar_lea.hbm %s3, %s929
          %s931 = sshll.u32 %s915, 4
          %s932 = int_to_ptr.vmem [resolvable:$true] %s931
          %s933 = sshll.u32 %s930, 4
          %s934 = int_to_ptr.hbm [resolvable:$true] %s933
          %939 = dma.vmem_to_hbm [thread:$0]  %s932, 2048, %s934, %s912, 128, 128, 8
        $region48: #{tpu_custom_call.1} parent=31 // pred_fallthru
          _
        // Predicated region
        $region49: #{tpu_custom_call.1} parent=31 // pred_check
          %p940 = pneg %p168
        $region50: #{tpu_custom_call.1} parent=31 // pred_check_branch
          %942 = sbr.rel (%p940) target = $region52
        $region51: #{tpu_custom_call.1} parent=31 // pred_region
          %s943 = smul.u32 16, %s33
          %945 = vsyncadd %s917, 0
          %s946 = smul.addr %s32, 16
          %s947 = sadd.s32 %s943, %s946
          %s948 = smul.addr %s947, 8
          %s949 = scalar_lea.hbm %s4, %s948
          %s950 = sshll.u32 %s920, 4
          %s951 = int_to_ptr.vmem [resolvable:$true] %s950
          %s952 = sshll.u32 %s949, 4
          %s953 = int_to_ptr.hbm [resolvable:$true] %s952
          %958 = dma.vmem_to_hbm [thread:$0]  %s951, 2048, %s953, %s917, 128, 128, 8
        $region52: #{tpu_custom_call.1} parent=31 // pred_fallthru
          _
      $region32: #{tpu_custom_call.1} parent=5 // pred_fallthru
        _
      %p959 = scmp.le.s32.totalorder 2, %s23
      // Predicated region
      $region53: #{tpu_custom_call.1} parent=5 // pred_check
        %p960 = pneg %p959
      $region54: #{tpu_custom_call.1} parent=5 // pred_check_branch
        %962 = sbr.rel (%p960) target = $region56
      $region55: #{tpu_custom_call.1} parent=5 // pred_region
        %s963 = ssub.s32 %s23, 2
        // Predicated region
        $region57: #{tpu_custom_call.1} parent=55 // pred_check
          %p964 = pneg %p146
        $region58: #{tpu_custom_call.1} parent=55 // pred_check_branch
          %966 = sbr.rel (%p964) target = $region60
        $region59: #{tpu_custom_call.1} parent=55 // pred_region
          %s967 = sand.u32 %s131, 1
          %s968 = scalar_lea.sflag [#allocation4], %s967
          %s969 = sand.u32 %s131, 1
          %s970 = smul.addr %s969, 128
          %s971 = scalar_lea.vmem [#allocation8], %s970
          %973 = dma.done %s968, 2048
        $region60: #{tpu_custom_call.1} parent=55 // pred_fallthru
          _
        // Predicated region
        $region61: #{tpu_custom_call.1} parent=55 // pred_check
          %p974 = pneg %p174
        $region62: #{tpu_custom_call.1} parent=55 // pred_check_branch
          %976 = sbr.rel (%p974) target = $region64
        $region63: #{tpu_custom_call.1} parent=55 // pred_region
          %s977 = sand.u32 %s159, 1
          %s978 = scalar_lea.sflag [#allocation10], %s977
          %s979 = sand.u32 %s159, 1
          %s980 = smul.addr %s979, 128
          %s981 = scalar_lea.vmem [#allocation9], %s980
          %983 = dma.done %s978, 2048
        $region64: #{tpu_custom_call.1} parent=55 // pred_fallthru
          _
      $region56: #{tpu_custom_call.1} parent=5 // pred_fallthru
        _
    $region6: #{tpu_custom_call.1} parent=1 // loop_footer
      %s27 = sadd.s32 1, %s23
    $region7: #{tpu_custom_call.1} parent=1 // loop_footer_branch
      %22 = sbr.rel target = $region3
    $region8: #{tpu_custom_call.1} parent=1 // loop_exit
      _
    %984 = vsyncpa [#allocation3], 1
    %s985 = scalar_lea.sflag [#allocation3], 1
    %986 = vsyncpa %s985, 1
    %987 = vsyncpa [#allocation6], 1
    %s988 = scalar_lea.sflag [#allocation6], 1
    %989 = vsyncpa %s988, 1
    %990 = vsyncpa [#allocation4], 1
    %s991 = scalar_lea.sflag [#allocation4], 1
    %992 = vsyncpa %s991, 1
    %993 = vsyncpa [#allocation10], 1
    %s994 = scalar_lea.sflag [#allocation10], 1
    %995 = vsyncpa %s994, 1

</llo_original>
